<compile_context>
chip_gen: v7x
topology: tpu7x:2x2x1
jax: 0.10.0
libtpu: 0.0.40
codegen_flags: <defaults>
</compile_context>

<pallas_src>
import numpy as np

import jax
import jax.numpy as jnp
from jax import lax
from jax.experimental import pallas as pl
from jax.experimental.pallas import tpu as pltpu

_LANE = 128
_SUBLANE = 8


def _softplus(x):
    # Numerically stable softplus; exp/log1p run on the EUP (its own issue slot).
    return jnp.maximum(x, 0.0) + jnp.log1p(jnp.exp(-jnp.abs(x)))


def fcnn_kernel(x_ref, w0_ref, b0_ref, w1_ref, b1_ref, w2t_ref, b2_ref, o_ref):
    """Fused 3-layer MLP.

    x_ref  : (tile_b, D)  input dtype, batch-major (straight from HBM)
    w0_ref : (H0, D)      compute dtype (PyTorch layout)
    b0_ref : (H0, 1)      compute dtype
    w1_ref : (H1, H0)     compute dtype
    b1_ref : (H1, 1)      compute dtype
    w2t_ref: (H1, D)      compute dtype (= W2.T)
    b2_ref : (1, D)       f32
    o_ref  : (tile_b, D)  out dtype, batch-major
    """
    cdt = w0_ref.dtype                      # compute dtype (f32 or bf16)
    x = x_ref[...].astype(cdt)              # (tile_b, D)

    # Layer 0: contract D on both operands -> feature-major (H0, tile_b); the
    # batch lands on lanes, giving dense vregs for the softplus chain.
    h = lax.dot_general(w0_ref[...], x, (((1,), (1,)), ((), ())),
                        preferred_element_type=jnp.float32)
    h = _softplus(h.astype(cdt) + b0_ref[...])

    # Layer 1: plain (H1, H0) @ (H0, tile_b) -> (H1, tile_b).
    h = jnp.dot(w1_ref[...], h, preferred_element_type=jnp.float32)
    h = _softplus(h.astype(cdt) + b1_ref[...])

    # Layer 2: contract H1 (dim 0 of both operands) so the MXU emits the
    # batch-major (tile_b, D) result directly — no explicit output transpose.
    y = lax.dot_general(h, w2t_ref[...], (((0,), (0,)), ((), ())),
                        preferred_element_type=jnp.float32)
    o_ref[...] = (y + b2_ref[...]).astype(o_ref.dtype)


def _default_compute_dtype():
    """bf16 elementwise math on chips with bf16 VPU/EUP (v6e+), else f32 (v5e-)."""
    try:
        kind = jax.devices()[0].device_kind.lower()
    except Exception:
        return jnp.float32
    if any(v in kind for v in ("v2", "v3", "v4", "v5")):
        return jnp.float32
    return jnp.bfloat16


def _choose_tile_b(B, *, min_steps=4, cap=2048):
    """Biggest batch tile that still gives >= min_steps grid steps for large B
    (>= 2 pipelined steps per TensorCore on v7x), stays far inside VMEM (cap),
    and never blows a small batch up to the cap (round to 128/8 granule only)."""
    unit = _LANE if B >= _LANE else _SUBLANE
    full = pl.cdiv(B, unit) * unit
    tile = pl.cdiv(pl.cdiv(B, min_steps), unit) * unit
    return max(unit, min(cap, tile, full))


def fcnn_forward(x, params, *, tile_b=None, compute_dtype=None, out_dtype=None):
    """Fused FCNN forward.  x: (B, D).  params: w{i} (out, in), b{i} (out,)."""
    B, D = x.shape
    w0, b0 = params["w0"], params["b0"]
    w1, b1 = params["w1"], params["b1"]
    w2, b2 = params["w2"], params["b2"]
    H0, H1 = w0.shape[0], w1.shape[0]
    assert w0.shape == (H0, D) and w1.shape == (H1, H0) and w2.shape == (D, H1)

    if compute_dtype is None:
        compute_dtype = _default_compute_dtype()
    if out_dtype is None:
        out_dtype = x.dtype
    tb = _choose_tile_b(B) if tile_b is None else tile_b
    assert tb % _SUBLANE == 0, "tile_b must be a multiple of 8 (sublanes)"
    grid = (pl.cdiv(B, tb),)   # ragged last block handled by Pallas masking

    # Tiny weights/biases: cast/reshape once here (negligible), fully resident below.
    w0c = w0.astype(compute_dtype)
    w1c = w1.astype(compute_dtype)
    w2t = w2.T.astype(compute_dtype)                 # (H1, D) for the dim-0 contraction
    b0c = b0.astype(compute_dtype).reshape(H0, 1)    # feature-major hidden biases
    b1c = b1.astype(compute_dtype).reshape(H1, 1)
    b2c = b2.astype(jnp.float32).reshape(1, D)       # output bias stays f32

    def resident(a):
        # Whole array resident in VMEM (constant block index -> fetched once).
        return pl.BlockSpec(a.shape, lambda i: (0, 0))

    return pl.pallas_call(
        fcnn_kernel,
        out_shape=jax.ShapeDtypeStruct((B, D), out_dtype),
        grid_spec=pltpu.PrefetchScalarGridSpec(
            num_scalar_prefetch=0,
            grid=grid,
            in_specs=[
                pl.BlockSpec((tb, D), lambda i: (i, 0)),   # x tile over batch rows
                resident(w0c), resident(b0c),
                resident(w1c), resident(b1c),
                resident(w2t), resident(b2c),
            ],
            out_specs=pl.BlockSpec((tb, D), lambda i: (i, 0)),
        ),
        compiler_params=pltpu.CompilerParams(
            dimension_semantics=("parallel",),    # batch tiles shard across TCs
            vmem_limit_bytes=32 * 1024 * 1024,    # safe on all gens (v7x: 64 MiB phys)
        ),
    )(x, w0c, b0c, w1c, b1c, w2t, b2c)


def init_params(key, input_dim, hidden_dims):
    """Deterministic synthetic init, PyTorch Linear layout: W (out, in), b (out,)."""
    dims = [input_dim] + list(hidden_dims) + [input_dim]
    params = {}
    for idx, (fan_in, fan_out) in enumerate(zip(dims[:-1], dims[1:])):
        key, kw, kb = jax.random.split(key, 3)
        bound = 1.0 / np.sqrt(fan_in)
        params[f"w{idx}"] = jax.random.uniform(
            kw, (fan_out, fan_in), jnp.float32, -bound, bound)
        params[f"b{idx}"] = jax.random.uniform(
            kb, (fan_out,), jnp.float32, -bound, bound)
    return params


def reference_forward(x, params):
    h = _softplus(x @ params["w0"].T + params["b0"])
    h = _softplus(h @ params["w1"].T + params["b1"])
    return h @ params["w2"].T + params["b2"]


if __name__ == "__main__":
    # Shapes consistent with the module: FCNN(input_dim=16, hidden_dims=[32, 32]).
    input_dim, hidden_dims = 16, [32, 32]

    key = jax.random.PRNGKey(0)
    kp, kx1, kx2 = jax.random.split(key, 3)
    params = init_params(kp, input_dim, hidden_dims)

    # Case 1: tiny batch (grid = 1, tile == batch), exact f32 path, strict check.
    x_small = jax.random.normal(kx1, (8, input_dim), jnp.float32)
    y_small = jax.block_until_ready(
        fcnn_forward(x_small, params, compute_dtype=jnp.float32))
    np.testing.assert_allclose(
        np.asarray(y_small), np.asarray(reference_forward(x_small, params)),
        rtol=2e-5, atol=2e-5)

    # Case 2: ragged multi-step grid (1000 rows -> 4 tiles of 256, last block
    # partial), exact f32 path, strict check.
    x_big = jax.random.normal(kx2, (1000, input_dim), jnp.float32)
    ref_big = np.asarray(reference_forward(x_big, params))
    y_big = jax.block_until_ready(
        fcnn_forward(x_big, params, compute_dtype=jnp.float32))
    np.testing.assert_allclose(np.asarray(y_big), ref_big, rtol=2e-5, atol=2e-5)

    # Case 3: hardware-default compute dtype (bf16 softplus chain on v6e/v7x,
    # f32 on v5e and older) -- loose tolerance to cover the bf16 path.
    y_auto = jax.block_until_ready(fcnn_forward(x_big, params))
    np.testing.assert_allclose(np.asarray(y_auto.astype(jnp.float32)), ref_big,
                               rtol=1e-1, atol=1e-1)

    # Case 4: bf16 output writeback (HBM saver on bandwidth-bound v5e) with
    # exact f32 compute.
    y_bf16 = jax.block_until_ready(
        fcnn_forward(x_big, params, compute_dtype=jnp.float32,
                     out_dtype=jnp.bfloat16))
    np.testing.assert_allclose(np.asarray(y_bf16.astype(jnp.float32)), ref_big,
                               rtol=1e-2, atol=1e-2)

    print("KERNEL_OK")
</pallas_src>

<mosaic_0001>
module attributes {stable_mosaic.version = 11 : i64} {
  func.func @fcnn_kernel(%arg0: i32, %arg1: memref<8x16xf32, #tpu.memory_space<vmem>>, %arg2: memref<32x16xf32, #tpu.memory_space<vmem>>, %arg3: memref<32x1xf32, #tpu.memory_space<vmem>>, %arg4: memref<32x32xf32, #tpu.memory_space<vmem>>, %arg5: memref<32x1xf32, #tpu.memory_space<vmem>>, %arg6: memref<32x16xf32, #tpu.memory_space<vmem>>, %arg7: memref<1x16xf32, #tpu.memory_space<vmem>>, %arg8: memref<8x16xf32, #tpu.memory_space<vmem>>) attributes {dimension_semantics = [#tpu.dimension_semantics<parallel>], iteration_bounds = array<i64: 1>, scalar_prefetch = 0 : i64, scratch_operands = 0 : i64, tpu.core_type = #tpu.core_type<tc>, window_params = [{transform_indices = @transform_0, window_bounds = array<i64: 8, 16>}, {pipeline_mode = #tpu.pipeline_mode<synchronous>, transform_indices = @transform_1, window_bounds = array<i64: 32, 16>}, {pipeline_mode = #tpu.pipeline_mode<synchronous>, transform_indices = @transform_2, window_bounds = array<i64: 32, 1>}, {pipeline_mode = #tpu.pipeline_mode<synchronous>, transform_indices = @transform_3, window_bounds = array<i64: 32, 32>}, {pipeline_mode = #tpu.pipeline_mode<synchronous>, transform_indices = @transform_4, window_bounds = array<i64: 32, 1>}, {pipeline_mode = #tpu.pipeline_mode<synchronous>, transform_indices = @transform_5, window_bounds = array<i64: 32, 16>}, {pipeline_mode = #tpu.pipeline_mode<synchronous>, transform_indices = @transform_6, window_bounds = array<i64: 1, 16>}, {transform_indices = @transform_7, window_bounds = array<i64: 8, 16>}]} {
    %c0 = arith.constant 0 : index
    %c0_0 = arith.constant 0 : index
    %0 = vector.load %arg1[%c0, %c0_0] : memref<8x16xf32, #tpu.memory_space<vmem>>, vector<8x16xf32>
    %c0_1 = arith.constant 0 : index
    %c0_2 = arith.constant 0 : index
    %1 = vector.load %arg2[%c0_1, %c0_2] : memref<32x16xf32, #tpu.memory_space<vmem>>, vector<32x16xf32>
    %cst = arith.constant dense<0.000000e+00> : vector<32x8xf32>
    %2 = tpu.matmul %1, %0, %cst {dimension_numbers = #tpu.dot_dimension_numbers<[1], [1], [0], [0], [0, 0, 1, 0], [], []>} : vector<32x16xf32>, vector<8x16xf32>, vector<32x8xf32> -> vector<32x8xf32>
    %c0_3 = arith.constant 0 : index
    %c0_4 = arith.constant 0 : index
    %3 = vector.load %arg3[%c0_3, %c0_4] : memref<32x1xf32, #tpu.memory_space<vmem>>, vector<32x1xf32>
    %4 = vector.broadcast %3 : vector<32x1xf32> to vector<32x8xf32>
    %5 = arith.addf %2, %4 : vector<32x8xf32>
    %cst_5 = arith.constant 0.000000e+00 : f32
    %6 = vector.broadcast %cst_5 : f32 to vector<32x8xf32>
    %7 = arith.maximumf %5, %6 : vector<32x8xf32>
    %8 = math.absf %5 : vector<32x8xf32>
    %cst_6 = arith.constant 0.000000e+00 : f32
    %9 = vector.broadcast %cst_6 : f32 to vector<32x8xf32>
    %10 = arith.subf %9, %8 : vector<32x8xf32>
    %11 = math.exp %10 : vector<32x8xf32>
    %12 = math.log1p %11 : vector<32x8xf32>
    %13 = arith.addf %7, %12 : vector<32x8xf32>
    %c0_7 = arith.constant 0 : index
    %c0_8 = arith.constant 0 : index
    %14 = vector.load %arg4[%c0_7, %c0_8] : memref<32x32xf32, #tpu.memory_space<vmem>>, vector<32x32xf32>
    %cst_9 = arith.constant dense<0.000000e+00> : vector<32x8xf32>
    %15 = tpu.matmul %14, %13, %cst_9 {dimension_numbers = #tpu.dot_dimension_numbers<[1], [0], [0], [1], [0, 0, 1, 1], [], []>} : vector<32x32xf32>, vector<32x8xf32>, vector<32x8xf32> -> vector<32x8xf32>
    %c0_10 = arith.constant 0 : index
    %c0_11 = arith.constant 0 : index
    %16 = vector.load %arg5[%c0_10, %c0_11] : memref<32x1xf32, #tpu.memory_space<vmem>>, vector<32x1xf32>
    %17 = vector.broadcast %16 : vector<32x1xf32> to vector<32x8xf32>
    %18 = arith.addf %15, %17 : vector<32x8xf32>
    %cst_12 = arith.constant 0.000000e+00 : f32
    %19 = vector.broadcast %cst_12 : f32 to vector<32x8xf32>
    %20 = arith.maximumf %18, %19 : vector<32x8xf32>
    %21 = math.absf %18 : vector<32x8xf32>
    %cst_13 = arith.constant 0.000000e+00 : f32
    %22 = vector.broadcast %cst_13 : f32 to vector<32x8xf32>
    %23 = arith.subf %22, %21 : vector<32x8xf32>
    %24 = math.exp %23 : vector<32x8xf32>
    %25 = math.log1p %24 : vector<32x8xf32>
    %26 = arith.addf %20, %25 : vector<32x8xf32>
    %c0_14 = arith.constant 0 : index
    %c0_15 = arith.constant 0 : index
    %27 = vector.load %arg6[%c0_14, %c0_15] : memref<32x16xf32, #tpu.memory_space<vmem>>, vector<32x16xf32>
    %cst_16 = arith.constant dense<0.000000e+00> : vector<8x16xf32>
    %28 = tpu.matmul %26, %27, %cst_16 {dimension_numbers = #tpu.dot_dimension_numbers<[0], [0], [1], [1], [0, 1, 1, 1], [], []>} : vector<32x8xf32>, vector<32x16xf32>, vector<8x16xf32> -> vector<8x16xf32>
    %c0_17 = arith.constant 0 : index
    %c0_18 = arith.constant 0 : index
    %29 = vector.load %arg7[%c0_17, %c0_18] : memref<1x16xf32, #tpu.memory_space<vmem>>, vector<1x16xf32>
    %30 = vector.broadcast %29 : vector<1x16xf32> to vector<8x16xf32>
    %31 = arith.addf %28, %30 : vector<8x16xf32>
    %c0_19 = arith.constant 0 : index
    %c0_20 = arith.constant 0 : index
    %32 = vector.load %arg8[%c0_19, %c0_20] : memref<8x16xf32, #tpu.memory_space<vmem>>, vector<8x16xf32>
    tpu.vector_store %arg8[%c0_19, %c0_20], %31 {strides = array<i32>} : memref<8x16xf32, #tpu.memory_space<vmem>>, vector<8x16xf32>,
    return
  }
  func.func @transform_0(%arg0: i32) -> (i32, i32) {
    %c0_i32 = arith.constant 0 : i32
    %c0_i32_0 = arith.constant 0 : i32
    return %arg0, %c0_i32 : i32, i32
  }
  func.func @transform_1(%arg0: i32) -> (i32, i32) {
    %c0_i32 = arith.constant 0 : i32
    %c0_i32_0 = arith.constant 0 : i32
    %c0_i32_1 = arith.constant 0 : i32
    return %c0_i32, %c0_i32_0 : i32, i32
  }
  func.func @transform_2(%arg0: i32) -> (i32, i32) {
    %c0_i32 = arith.constant 0 : i32
    %c0_i32_0 = arith.constant 0 : i32
    %c0_i32_1 = arith.constant 0 : i32
    return %c0_i32, %c0_i32_0 : i32, i32
  }
  func.func @transform_3(%arg0: i32) -> (i32, i32) {
    %c0_i32 = arith.constant 0 : i32
    %c0_i32_0 = arith.constant 0 : i32
    %c0_i32_1 = arith.constant 0 : i32
    return %c0_i32, %c0_i32_0 : i32, i32
  }
  func.func @transform_4(%arg0: i32) -> (i32, i32) {
    %c0_i32 = arith.constant 0 : i32
    %c0_i32_0 = arith.constant 0 : i32
    %c0_i32_1 = arith.constant 0 : i32
    return %c0_i32, %c0_i32_0 : i32, i32
  }
  func.func @transform_5(%arg0: i32) -> (i32, i32) {
    %c0_i32 = arith.constant 0 : i32
    %c0_i32_0 = arith.constant 0 : i32
    %c0_i32_1 = arith.constant 0 : i32
    return %c0_i32, %c0_i32_0 : i32, i32
  }
  func.func @transform_6(%arg0: i32) -> (i32, i32) {
    %c0_i32 = arith.constant 0 : i32
    %c0_i32_0 = arith.constant 0 : i32
    %c0_i32_1 = arith.constant 0 : i32
    return %c0_i32, %c0_i32_0 : i32, i32
  }
  func.func @transform_7(%arg0: i32) -> (i32, i32) {
    %c0_i32 = arith.constant 0 : i32
    %c0_i32_0 = arith.constant 0 : i32
    return %arg0, %c0_i32 : i32, i32
  }
}

</mosaic_0001>

<llo_original>
// kernel: tpu_custom_call.1
$region0: #{tpu_custom_call.1}
  #allocation0 [shape = 'u32[]', space=smem, size = 0x4, offset = 0x4, fixed_abs, tag = 'smem constant byte address 0x4 - core index']
  #allocation1 [shape = 'u32[144,128]{1,0:T(1,128)}', space=vmem, size = 0x12000, scoped, tag = 'internal scratch']
  %s0 = inlined_call_operand.vmem [shape: f32[8,16], index: 0, kind: input, shape index: {}]
  %s1 = inlined_call_operand.vmem [shape: f32[32,16], index: 1, kind: input, shape index: {}]
  %s2 = inlined_call_operand.vmem [shape: f32[32,1], index: 2, kind: input, shape index: {}]
  %s3 = inlined_call_operand.vmem [shape: f32[32,32], index: 3, kind: input, shape index: {}]
  %s4 = inlined_call_operand.vmem [shape: f32[32,1], index: 4, kind: input, shape index: {}]
  %s5 = inlined_call_operand.vmem [shape: f32[32,16], index: 5, kind: input, shape index: {}]
  %s6 = inlined_call_operand.vmem [shape: f32[1,16], index: 6, kind: input, shape index: {}]
  %s7 = inlined_call_operand.hbm [shape: f32[8,16], index: 7, kind: output, shape index: {}]
  %s8 = sld [smem:[#allocation0]]
  $region38: #{tpu_custom_call.1} parent=0
    _
  %s10 = ssub.s32 1, %s8
  %s11 = scalar_select 0, %s10, %s8
  $region1: #{tpu_custom_call.1} parent=0
    #allocation2 [shape = 'u8[4096]{0}', space=vmem, size = 0x1000, scoped, tag = 'output window, operand 0, single buffered']
    #allocation3 [shape = 's32[1]{0}', space=sflag, size = 0x4, scoped, tag = 'scoped memory for tpu_custom_call.1']
    %12 = vsyncpa [#allocation3], 0
    // Predicated region
    $region2: #{tpu_custom_call.1} parent=1 // pred_check
      _
    $region3: #{tpu_custom_call.1} parent=1 // pred_check_branch
      %14 = sbr.rel (0) target = $region5
    $region4: #{tpu_custom_call.1} parent=1 // pred_region
      _
    $region5: #{tpu_custom_call.1} parent=1 // pred_fallthru
      _
    // Predicated region
    $region6: #{tpu_custom_call.1} parent=1 // pred_check
      _
    $region7: #{tpu_custom_call.1} parent=1 // pred_check_branch
      %16 = sbr.rel (0) target = $region9
    $region8: #{tpu_custom_call.1} parent=1 // pred_region
      _
    $region9: #{tpu_custom_call.1} parent=1 // pred_fallthru
      _
    // Predicated region
    $region10: #{tpu_custom_call.1} parent=1 // pred_check
      _
    $region11: #{tpu_custom_call.1} parent=1 // pred_check_branch
      %18 = sbr.rel (0) target = $region13
    $region12: #{tpu_custom_call.1} parent=1 // pred_region
      _
    $region13: #{tpu_custom_call.1} parent=1 // pred_fallthru
      _
    // Predicated region
    $region14: #{tpu_custom_call.1} parent=1 // pred_check
      _
    $region15: #{tpu_custom_call.1} parent=1 // pred_check_branch
      %20 = sbr.rel (0) target = $region17
    $region16: #{tpu_custom_call.1} parent=1 // pred_region
      _
    $region17: #{tpu_custom_call.1} parent=1 // pred_fallthru
      _
    // Predicated region
    $region18: #{tpu_custom_call.1} parent=1 // pred_check
      _
    $region19: #{tpu_custom_call.1} parent=1 // pred_check_branch
      %22 = sbr.rel (0) target = $region21
    $region20: #{tpu_custom_call.1} parent=1 // pred_region
      _
    $region21: #{tpu_custom_call.1} parent=1 // pred_fallthru
      _
    // Predicated region
    $region22: #{tpu_custom_call.1} parent=1 // pred_check
      _
    $region23: #{tpu_custom_call.1} parent=1 // pred_check_branch
      %24 = sbr.rel (0) target = $region25
    $region24: #{tpu_custom_call.1} parent=1 // pred_region
      _
    $region25: #{tpu_custom_call.1} parent=1 // pred_fallthru
      _
    // Predicated region
    $region26: #{tpu_custom_call.1} parent=1 // pred_check
      _
    $region27: #{tpu_custom_call.1} parent=1 // pred_check_branch
      %26 = sbr.rel (0) target = $region29
    $region28: #{tpu_custom_call.1} parent=1 // pred_region
      _
    $region29: #{tpu_custom_call.1} parent=1 // pred_fallthru
      _
    %v27 = vld [vmem:[%s0] sm:$0xff]
    %v28 = vld [vmem:[%s1] sm:$0xff]
    %v29 = vld [vmem:[%s1 + $0x8] sm:$0xff]
    %v30 = vld [vmem:[%s1 + $0x10] sm:$0xff]
    %v31 = vld [vmem:[%s1 + $0x18] sm:$0xff]
    %v32 = vld [vmem:[%s2] sm:$0xff]
    %v33 = vld [vmem:[%s2 + $0x8] sm:$0xff]
    %v34 = vld [vmem:[%s2 + $0x10] sm:$0xff]
    %v35 = vld [vmem:[%s2 + $0x18] sm:$0xff]
    %37 = vset.pattern.permute.xlu0 0
    %38 = vperm.xlu0 %37, %v32
    %v39 = vpop.permute.xlu0 %38
    %42 = vset.pattern.permute.xlu0 0
    %43 = vperm.xlu0 %42, %v33
    %v44 = vpop.permute.xlu0 %43
    %47 = vset.pattern.permute.xlu0 0
    %48 = vperm.xlu0 %47, %v34
    %v49 = vpop.permute.xlu0 %48
    %52 = vset.pattern.permute.xlu0 0
    %53 = vperm.xlu0 %52, %v35
    %v54 = vpop.permute.xlu0 %53
    %vm56 = vcmask 130048
    %v58 = vsel %vm56, %v28, 0
    %v61 = vsel %vm56, %v29, 0
    %v64 = vsel %vm56, %v30, 0
    %v67 = vsel %vm56, %v31, 0
    %v70 = vsel %vm56, %v27, 0
    %72 = vmatprep.subr.mxu0 0.0
    %73 = vmatpush1.xpose.msra.mxu0 %v70
    %74 = vmatprep.subr.mxu0 0.0
    %75 = vmatpush1.xpose.msra.mxu0 0.0
    %76 = vmatprep.subr.mxu0 0.0
    %77 = vmatpush1.xpose.msra.mxu0 0.0
    %78 = vmatprep.subr.mxu0 0.0
    %79 = vmatpush1.xpose.msra.mxu0 0.0
    %80 = vmatprep.subr.mxu0 0.0
    %81 = vmatpush1.xpose.msra.mxu0 0.0
    %82 = vmatprep.subr.mxu0 0.0
    %83 = vmatpush1.xpose.msra.mxu0 0.0
    %84 = vmatprep.subr.mxu0 0.0
    %85 = vmatpush1.xpose.msra.mxu0 0.0
    %86 = vmatprep.subr.mxu0 0.0
    %87 = vmatpush1.xpose.msra.mxu0 0.0
    %88 = vmatprep.subr.mxu0 0.0
    %89 = vmatpush1.xpose.msra.mxu0 0.0
    %90 = vmatprep.subr.mxu0 0.0
    %91 = vmatpush1.xpose.msra.mxu0 0.0
    %92 = vmatprep.subr.mxu0 0.0
    %93 = vmatpush1.xpose.msra.mxu0 0.0
    %94 = vmatprep.subr.mxu0 0.0
    %95 = vmatpush1.xpose.msra.mxu0 0.0
    %96 = vmatprep.subr.mxu0 0.0
    %97 = vmatpush1.xpose.msra.mxu0 0.0
    %98 = vmatprep.subr.mxu0 0.0
    %99 = vmatpush1.xpose.msra.mxu0 0.0
    %100 = vmatprep.subr.mxu0 0.0
    %101 = vmatpush1.xpose.msra.mxu0 0.0
    %102 = vmatprep.subr.mxu0 0.0
    %103 = vmatpush1.xpose.msra.mxu0 0.0
    %104 = vmatprep.subr.mxu0 0.0
    %105 = vmatpush1.xpose.msra.mxu0 0.0
    %106 = vmatprep.subr.mxu0 0.0
    %107 = vmatpush1.xpose.msra.mxu0 0.0
    %108 = vmatprep.subr.mxu0 0.0
    %109 = vmatpush1.xpose.msra.mxu0 0.0
    %110 = vmatprep.subr.mxu0 0.0
    %111 = vmatpush1.xpose.msra.mxu0 0.0
    %112 = vmatprep.subr.mxu0 0.0
    %113 = vmatpush1.xpose.msra.mxu0 0.0
    %114 = vmatprep.subr.mxu0 0.0
    %115 = vmatpush1.xpose.msra.mxu0 0.0
    %116 = vmatprep.subr.mxu0 0.0
    %117 = vmatpush1.xpose.msra.mxu0 0.0
    %118 = vmatprep.subr.mxu0 0.0
    %119 = vmatpush1.xpose.msra.mxu0 0.0
    %120 = vmatprep.subr.mxu0 0.0
    %121 = vmatpush1.xpose.msra.mxu0 0.0
    %122 = vmatprep.subr.mxu0 0.0
    %123 = vmatpush1.xpose.msra.mxu0 0.0
    %124 = vmatprep.subr.mxu0 0.0
    %125 = vmatpush1.xpose.msra.mxu0 0.0
    %126 = vmatprep.subr.mxu0 0.0
    %127 = vmatpush1.xpose.msra.mxu0 0.0
    %128 = vmatprep.subr.mxu0 0.0
    %129 = vmatpush1.xpose.msra.mxu0 0.0
    %130 = vmatprep.subr.mxu0 0.0
    %131 = vmatpush1.xpose.msra.mxu0 0.0
    %132 = vmatprep.subr.mxu0 0.0
    %133 = vmatpush1.xpose.msra.mxu0 0.0
    %134 = vmatprep.subr.mxu0 0.0
    %135 = vmatpush1.xpose.msra.mxu0 0.0
    %136 = vmatprep.mubr.f32.mxu0 0.0
    %137 = vmatmul.mubr.f32.gmra.mrb[0].mxu0 %v58
    %v138 = vpop.f32.mrb[0].mxu0
    %v139 = vadd.f32 %v39, %v138
    %v140 = vpop.f32.mrb[0].mxu0
    %141 = vmatprep.mubr.f32.mxu0 0.0
    %142 = vmatmul.mubr.f32.gmra.mrb[0].mxu0 %v61
    %v143 = vpop.f32.mrb[0].mxu0
    %v144 = vadd.f32 %v44, %v143
    %v145 = vpop.f32.mrb[0].mxu0
    %146 = vmatprep.mubr.f32.mxu0 0.0
    %147 = vmatmul.mubr.f32.gmra.mrb[0].mxu0 %v64
    %v148 = vpop.f32.mrb[0].mxu0
    %v149 = vadd.f32 %v49, %v148
    %v150 = vpop.f32.mrb[0].mxu0
    %151 = vmatprep.mubr.f32.mxu0 0.0
    %152 = vmatmul.mubr.f32.gmra.mrb[0].mxu0 %v67
    %v153 = vpop.f32.mrb[0].mxu0
    %v154 = vadd.f32 %v54, %v153
    %v155 = vpop.f32.mrb[0].mxu0
    %156 = vdwg.mxu0
    %v157 = vmax.f32 %v139, 0.0
    %v158 = vmax.f32 %v144, 0.0
    %v159 = vmax.f32 %v149, 0.0
    %v160 = vmax.f32 %v154, 0.0
    %v161 = vand.u32 2147483647, %v139
    %v162 = vand.u32 2147483647, %v144
    %v163 = vand.u32 2147483647, %v149
    %v164 = vand.u32 2147483647, %v154
    %v165 = vsub.f32 0.0, %v161
    %v166 = vsub.f32 0.0, %v162
    %v167 = vsub.f32 0.0, %v163
    %v168 = vsub.f32 0.0, %v164
    %v169 = vmul.f32 %v165, 1.442695
    %v170 = vpow.pop %v169
    %v171 = vmul.f32 %v166, 1.442695
    %v172 = vpow.pop %v171
    %v173 = vmul.f32 %v167, 1.442695
    %v174 = vpow.pop %v173
    %v175 = vmul.f32 %v168, 1.442695
    %v176 = vpow.pop %v175
    %v177 = vadd.f32 %v170, 1.0
    %v178 = vlog2.pop %v177
    %v179 = vmul.f32 %v178, 0.6931472
    %v180 = vmul.f32 -0.5, %v170
    %v181 = vadd.f32 %v180, 1.0
    %v182 = vmul.f32 %v181, %v170
    %v183 = vand.u32 2147483647, %v170
    %vm184 = vcmp.lt.f32.partialorder %v183, 0.0004427343
    %v185 = vsel %vm184, %v182, %v179
    %v186 = vadd.f32 %v172, 1.0
    %v187 = vlog2.pop %v186
    %v188 = vmul.f32 %v187, 0.6931472
    %v189 = vmul.f32 -0.5, %v172
    %v190 = vadd.f32 %v189, 1.0
    %v191 = vmul.f32 %v190, %v172
    %v192 = vand.u32 2147483647, %v172
    %vm193 = vcmp.lt.f32.partialorder %v192, 0.0004427343
    %v194 = vsel %vm193, %v191, %v188
    %v195 = vadd.f32 %v174, 1.0
    %v196 = vlog2.pop %v195
    %v197 = vmul.f32 %v196, 0.6931472
    %v198 = vmul.f32 -0.5, %v174
    %v199 = vadd.f32 %v198, 1.0
    %v200 = vmul.f32 %v199, %v174
    %v201 = vand.u32 2147483647, %v174
    %vm202 = vcmp.lt.f32.partialorder %v201, 0.0004427343
    %v203 = vsel %vm202, %v200, %v197
    %v204 = vadd.f32 %v176, 1.0
    %v205 = vlog2.pop %v204
    %v206 = vmul.f32 %v205, 0.6931472
    %v207 = vmul.f32 -0.5, %v176
    %v208 = vadd.f32 %v207, 1.0
    %v209 = vmul.f32 %v208, %v176
    %v210 = vand.u32 2147483647, %v176
    %vm211 = vcmp.lt.f32.partialorder %v210, 0.0004427343
    %v212 = vsel %vm211, %v209, %v206
    %v213 = vadd.f32 %v157, %v185
    %v214 = vadd.f32 %v158, %v194
    %v215 = vadd.f32 %v159, %v203
    %v216 = vadd.f32 %v160, %v212
    %v217 = vld [vmem:[%s3] sm:$0xff]
    %v218 = vld [vmem:[%s3 + $0x8] sm:$0xff]
    %v219 = vld [vmem:[%s3 + $0x10] sm:$0xff]
    %v220 = vld [vmem:[%s3 + $0x18] sm:$0xff]
    %v221 = vld [vmem:[%s4] sm:$0xff]
    %v222 = vld [vmem:[%s4 + $0x8] sm:$0xff]
    %v223 = vld [vmem:[%s4 + $0x10] sm:$0xff]
    %v224 = vld [vmem:[%s4 + $0x18] sm:$0xff]
    %226 = vset.pattern.permute.xlu0 0
    %227 = vperm.xlu0 %226, %v221
    %v228 = vpop.permute.xlu0 %227
    %231 = vset.pattern.permute.xlu0 0
    %232 = vperm.xlu0 %231, %v222
    %v233 = vpop.permute.xlu0 %232
    %236 = vset.pattern.permute.xlu0 0
    %237 = vperm.xlu0 %236, %v223
    %v238 = vpop.permute.xlu0 %237
    %241 = vset.pattern.permute.xlu0 0
    %242 = vperm.xlu0 %241, %v224
    %v243 = vpop.permute.xlu0 %242
    %vm245 = vcmask 261120
    %v247 = vsel %vm245, %v217, 0
    %v250 = vsel %vm245, %v218, 0
    %v253 = vsel %vm245, %v219, 0
    %v256 = vsel %vm245, %v220, 0
    %258 = vmatprep.subr.mxu0 0.0
    %259 = vmatpush1.msra.mxu0 %v213
    %260 = vmatprep.subr.mxu0 0.0
    %261 = vmatpush1.msra.mxu0 %v214
    %262 = vmatprep.subr.mxu0 0.0
    %263 = vmatpush1.msra.mxu0 %v215
    %264 = vmatprep.subr.mxu0 0.0
    %265 = vmatpush1.msra.mxu0 %v216
    %266 = vmatprep.subr.mxu0 0.0
    %267 = vmatpush1.msra.mxu0 0.0
    %268 = vmatprep.subr.mxu0 0.0
    %269 = vmatpush1.msra.mxu0 0.0
    %270 = vmatprep.subr.mxu0 0.0
    %271 = vmatpush1.msra.mxu0 0.0
    %272 = vmatprep.subr.mxu0 0.0
    %273 = vmatpush1.msra.mxu0 0.0
    %274 = vmatprep.subr.mxu0 0.0
    %275 = vmatpush1.msra.mxu0 0.0
    %276 = vmatprep.subr.mxu0 0.0
    %277 = vmatpush1.msra.mxu0 0.0
    %278 = vmatprep.subr.mxu0 0.0
    %279 = vmatpush1.msra.mxu0 0.0
    %280 = vmatprep.subr.mxu0 0.0
    %281 = vmatpush1.msra.mxu0 0.0
    %282 = vmatprep.subr.mxu0 0.0
    %283 = vmatpush1.msra.mxu0 0.0
    %284 = vmatprep.subr.mxu0 0.0
    %285 = vmatpush1.msra.mxu0 0.0
    %286 = vmatprep.subr.mxu0 0.0
    %287 = vmatpush1.msra.mxu0 0.0
    %288 = vmatprep.subr.mxu0 0.0
    %289 = vmatpush1.msra.mxu0 0.0
    %290 = vmatprep.subr.mxu0 0.0
    %291 = vmatpush1.msra.mxu0 0.0
    %292 = vmatprep.subr.mxu0 0.0
    %293 = vmatpush1.msra.mxu0 0.0
    %294 = vmatprep.subr.mxu0 0.0
    %295 = vmatpush1.msra.mxu0 0.0
    %296 = vmatprep.subr.mxu0 0.0
    %297 = vmatpush1.msra.mxu0 0.0
    %298 = vmatprep.subr.mxu0 0.0
    %299 = vmatpush1.msra.mxu0 0.0
    %300 = vmatprep.subr.mxu0 0.0
    %301 = vmatpush1.msra.mxu0 0.0
    %302 = vmatprep.subr.mxu0 0.0
    %303 = vmatpush1.msra.mxu0 0.0
    %304 = vmatprep.subr.mxu0 0.0
    %305 = vmatpush1.msra.mxu0 0.0
    %306 = vmatprep.subr.mxu0 0.0
    %307 = vmatpush1.msra.mxu0 0.0
    %308 = vmatprep.subr.mxu0 0.0
    %309 = vmatpush1.msra.mxu0 0.0
    %310 = vmatprep.subr.mxu0 0.0
    %311 = vmatpush1.msra.mxu0 0.0
    %312 = vmatprep.subr.mxu0 0.0
    %313 = vmatpush1.msra.mxu0 0.0
    %314 = vmatprep.subr.mxu0 0.0
    %315 = vmatpush1.msra.mxu0 0.0
    %316 = vmatprep.subr.mxu0 0.0
    %317 = vmatpush1.msra.mxu0 0.0
    %318 = vmatprep.subr.mxu0 0.0
    %319 = vmatpush1.msra.mxu0 0.0
    %320 = vmatprep.subr.mxu0 0.0
    %321 = vmatpush1.msra.mxu0 0.0
    %322 = vmatprep.mubr.f32.mxu0 0.0
    %323 = vmatmul.mubr.f32.gmra.mrb[0].mxu0 %v247
    %v324 = vpop.f32.mrb[0].mxu0
    %v325 = vadd.f32 %v228, %v324
    %v326 = vpop.f32.mrb[0].mxu0
    %327 = vmatprep.mubr.f32.mxu0 0.0
    %328 = vmatmul.mubr.f32.gmra.mrb[0].mxu0 %v250
    %v329 = vpop.f32.mrb[0].mxu0
    %v330 = vadd.f32 %v233, %v329
    %v331 = vpop.f32.mrb[0].mxu0
    %332 = vmatprep.mubr.f32.mxu0 0.0
    %333 = vmatmul.mubr.f32.gmra.mrb[0].mxu0 %v253
    %v334 = vpop.f32.mrb[0].mxu0
    %v335 = vadd.f32 %v238, %v334
    %v336 = vpop.f32.mrb[0].mxu0
    %337 = vmatprep.mubr.f32.mxu0 0.0
    %338 = vmatmul.mubr.f32.gmra.mrb[0].mxu0 %v256
    %v339 = vpop.f32.mrb[0].mxu0
    %v340 = vadd.f32 %v243, %v339
    %v341 = vpop.f32.mrb[0].mxu0
    %342 = vdwg.mxu0
    %v343 = vmax.f32 %v325, 0.0
    %v344 = vmax.f32 %v330, 0.0
    %v345 = vmax.f32 %v335, 0.0
    %v346 = vmax.f32 %v340, 0.0
    %v347 = vand.u32 2147483647, %v325
    %v348 = vand.u32 2147483647, %v330
    %v349 = vand.u32 2147483647, %v335
    %v350 = vand.u32 2147483647, %v340
    %v351 = vsub.f32 0.0, %v347
    %v352 = vsub.f32 0.0, %v348
    %v353 = vsub.f32 0.0, %v349
    %v354 = vsub.f32 0.0, %v350
    %v355 = vmul.f32 %v351, 1.442695
    %v356 = vpow.pop %v355
    %v357 = vmul.f32 %v352, 1.442695
    %v358 = vpow.pop %v357
    %v359 = vmul.f32 %v353, 1.442695
    %v360 = vpow.pop %v359
    %v361 = vmul.f32 %v354, 1.442695
    %v362 = vpow.pop %v361
    %v363 = vadd.f32 %v356, 1.0
    %v364 = vlog2.pop %v363
    %v365 = vmul.f32 %v364, 0.6931472
    %v366 = vmul.f32 -0.5, %v356
    %v367 = vadd.f32 %v366, 1.0
    %v368 = vmul.f32 %v367, %v356
    %v369 = vand.u32 2147483647, %v356
    %vm370 = vcmp.lt.f32.partialorder %v369, 0.0004427343
    %v371 = vsel %vm370, %v368, %v365
    %v372 = vadd.f32 %v358, 1.0
    %v373 = vlog2.pop %v372
    %v374 = vmul.f32 %v373, 0.6931472
    %v375 = vmul.f32 -0.5, %v358
    %v376 = vadd.f32 %v375, 1.0
    %v377 = vmul.f32 %v376, %v358
    %v378 = vand.u32 2147483647, %v358
    %vm379 = vcmp.lt.f32.partialorder %v378, 0.0004427343
    %v380 = vsel %vm379, %v377, %v374
    %v381 = vadd.f32 %v360, 1.0
    %v382 = vlog2.pop %v381
    %v383 = vmul.f32 %v382, 0.6931472
    %v384 = vmul.f32 -0.5, %v360
    %v385 = vadd.f32 %v384, 1.0
    %v386 = vmul.f32 %v385, %v360
    %v387 = vand.u32 2147483647, %v360
    %vm388 = vcmp.lt.f32.partialorder %v387, 0.0004427343
    %v389 = vsel %vm388, %v386, %v383
    %v390 = vadd.f32 %v362, 1.0
    %v391 = vlog2.pop %v390
    %v392 = vmul.f32 %v391, 0.6931472
    %v393 = vmul.f32 -0.5, %v362
    %v394 = vadd.f32 %v393, 1.0
    %v395 = vmul.f32 %v394, %v362
    %v396 = vand.u32 2147483647, %v362
    %vm397 = vcmp.lt.f32.partialorder %v396, 0.0004427343
    %v398 = vsel %vm397, %v395, %v392
    %v399 = vadd.f32 %v343, %v371
    %v400 = vadd.f32 %v344, %v380
    %v401 = vadd.f32 %v345, %v389
    %v402 = vadd.f32 %v346, %v398
    %v403 = vld [vmem:[%s5] sm:$0xff]
    %v404 = vld [vmem:[%s5 + $0x8] sm:$0xff]
    %v405 = vld [vmem:[%s5 + $0x10] sm:$0xff]
    %v406 = vld [vmem:[%s5 + $0x18] sm:$0xff]
    %v407 = vld [vmem:[%s6] sm:$0x1]
    %v409 = vlaneseq
    %v410 = vshrl.u32 %v409, 7
    %v411 = vsub.s32 0, %v410
    %v412 = vrot.slane %v407, %v411
    %414 = vxpose.xlu0.b32.start [1/16] %v399, 128
    %415 = vxpose.xlu0.b32.cont [2/16] %v400, 128
    %416 = vxpose.xlu0.b32.cont [3/16] %v401, 128
    %417 = vxpose.xlu0.b32.cont [4/16] %v402, 128
    %418 = vxpose.xlu0.b32.cont [5/16] 0.0, 128
    %419 = vxpose.xlu0.b32.cont [6/16] 0.0, 128
    %420 = vxpose.xlu0.b32.cont [7/16] 0.0, 128
    %421 = vxpose.xlu0.b32.cont [8/16] 0.0, 128
    %422 = vxpose.xlu0.b32.cont [9/16] 0.0, 128
    %423 = vxpose.xlu0.b32.cont [10/16] 0.0, 128
    %424 = vxpose.xlu0.b32.cont [11/16] 0.0, 128
    %425 = vxpose.xlu0.b32.cont [12/16] 0.0, 128
    %426 = vxpose.xlu0.b32.cont [13/16] 0.0, 128
    %427 = vxpose.xlu0.b32.cont [14/16] 0.0, 128
    %428 = vxpose.xlu0.b32.cont [15/16] 0.0, 128
    %429 = vxpose.xlu0.b32.end [16/16] 0.0, 128
    %v430 = vpop.trf.xlu0
    %v431 = vpop.trf.xlu0
    %v432 = vpop.trf.xlu0
    %v433 = vpop.trf.xlu0
    %v434 = vpop.trf.xlu0
    %v435 = vpop.trf.xlu0
    %v436 = vpop.trf.xlu0
    %v437 = vpop.trf.xlu0
    %v438 = vpop.trf.xlu0
    %v439 = vpop.trf.xlu0
    %v440 = vpop.trf.xlu0
    %v441 = vpop.trf.xlu0
    %v442 = vpop.trf.xlu0
    %v443 = vpop.trf.xlu0
    %v444 = vpop.trf.xlu0
    %v445 = vpop.trf.xlu0
    %v447 = vsel %vm245, %v430, 0
    %449 = vmatprep.subr.mxu0 0.0
    %450 = vmatpush1.msra.mxu0 %v403
    %451 = vmatprep.subr.mxu0 0.0
    %452 = vmatpush1.msra.mxu0 %v404
    %453 = vmatprep.subr.mxu0 0.0
    %454 = vmatpush1.msra.mxu0 %v405
    %455 = vmatprep.subr.mxu0 0.0
    %456 = vmatpush1.msra.mxu0 %v406
    %457 = vmatprep.subr.mxu0 0.0
    %458 = vmatpush1.msra.mxu0 0.0
    %459 = vmatprep.subr.mxu0 0.0
    %460 = vmatpush1.msra.mxu0 0.0
    %461 = vmatprep.subr.mxu0 0.0
    %462 = vmatpush1.msra.mxu0 0.0
    %463 = vmatprep.subr.mxu0 0.0
    %464 = vmatpush1.msra.mxu0 0.0
    %465 = vmatprep.subr.mxu0 0.0
    %466 = vmatpush1.msra.mxu0 0.0
    %467 = vmatprep.subr.mxu0 0.0
    %468 = vmatpush1.msra.mxu0 0.0
    %469 = vmatprep.subr.mxu0 0.0
    %470 = vmatpush1.msra.mxu0 0.0
    %471 = vmatprep.subr.mxu0 0.0
    %472 = vmatpush1.msra.mxu0 0.0
    %473 = vmatprep.subr.mxu0 0.0
    %474 = vmatpush1.msra.mxu0 0.0
    %475 = vmatprep.subr.mxu0 0.0
    %476 = vmatpush1.msra.mxu0 0.0
    %477 = vmatprep.subr.mxu0 0.0
    %478 = vmatpush1.msra.mxu0 0.0
    %479 = vmatprep.subr.mxu0 0.0
    %480 = vmatpush1.msra.mxu0 0.0
    %481 = vmatprep.subr.mxu0 0.0
    %482 = vmatpush1.msra.mxu0 0.0
    %483 = vmatprep.subr.mxu0 0.0
    %484 = vmatpush1.msra.mxu0 0.0
    %485 = vmatprep.subr.mxu0 0.0
    %486 = vmatpush1.msra.mxu0 0.0
    %487 = vmatprep.subr.mxu0 0.0
    %488 = vmatpush1.msra.mxu0 0.0
    %489 = vmatprep.subr.mxu0 0.0
    %490 = vmatpush1.msra.mxu0 0.0
    %491 = vmatprep.subr.mxu0 0.0
    %492 = vmatpush1.msra.mxu0 0.0
    %493 = vmatprep.subr.mxu0 0.0
    %494 = vmatpush1.msra.mxu0 0.0
    %495 = vmatprep.subr.mxu0 0.0
    %496 = vmatpush1.msra.mxu0 0.0
    %497 = vmatprep.subr.mxu0 0.0
    %498 = vmatpush1.msra.mxu0 0.0
    %499 = vmatprep.subr.mxu0 0.0
    %500 = vmatpush1.msra.mxu0 0.0
    %501 = vmatprep.subr.mxu0 0.0
    %502 = vmatpush1.msra.mxu0 0.0
    %503 = vmatprep.subr.mxu0 0.0
    %504 = vmatpush1.msra.mxu0 0.0
    %505 = vmatprep.subr.mxu0 0.0
    %506 = vmatpush1.msra.mxu0 0.0
    %507 = vmatprep.subr.mxu0 0.0
    %508 = vmatpush1.msra.mxu0 0.0
    %509 = vmatprep.subr.mxu0 0.0
    %510 = vmatpush1.msra.mxu0 0.0
    %511 = vmatprep.subr.mxu0 0.0
    %512 = vmatpush1.msra.mxu0 0.0
    %513 = vmatprep.mubr.f32.mxu0 0.0
    %514 = vmatmul.mubr.f32.gmra.mrb[0].mxu0 %v447
    %v515 = vpop.f32.mrb[0].mxu0
    %v516 = vadd.f32 %v412, %v515
    %v517 = vpop.f32.mrb[0].mxu0
    %518 = vdwg.mxu0
    %519 = vst.msk [vmem:[#allocation2] sm:$0xff] %vm56, %v516
    // Predicated region
    $region30: #{tpu_custom_call.1} parent=1 // pred_check
      _
    $region31: #{tpu_custom_call.1} parent=1 // pred_check_branch
      %521 = sbr.rel (0) target = $region33
    $region32: #{tpu_custom_call.1} parent=1 // pred_region
      %s523 = ssub.s32 128, 128
      %524 = vsyncadd [#allocation3], %s523
      %s526 = sshll.u32 [#allocation2], 4
      %s527 = int_to_ptr.vmem [resolvable:$true] %s526
      %529 = dma.vmem_to_hbm [thread:$0]  %s527, 128, %s7, [#allocation3]
    $region33: #{tpu_custom_call.1} parent=1 // pred_fallthru
      _
    // Predicated region
    $region34: #{tpu_custom_call.1} parent=1 // pred_check
      _
    $region35: #{tpu_custom_call.1} parent=1 // pred_check_branch
      %531 = sbr.rel (0) target = $region37
    $region36: #{tpu_custom_call.1} parent=1 // pred_region
      %532 = dma.done [#allocation3], 128
    $region37: #{tpu_custom_call.1} parent=1 // pred_fallthru
      _
    %533 = vsyncpa [#allocation3], 1

</llo_original>
